<compile_context>
chip_gen: v6e
topology: v6e:2x2x1
jax: 0.10.0
libtpu: 0.0.40
codegen_flags: <defaults>
</compile_context>

<pallas_src>
import functools

import jax
import jax.numpy as jnp
from jax import lax
from jax.experimental import pallas as pl
from jax.experimental.pallas import tpu as pltpu


def _fused_lightgcn_kernel(adj_t_ref, ego0_t_ref, out_t_ref, *, n_layers):
    """out^T = mean_{l=0..L} ego_l^T   with   ego_{l+1} = adj @ ego_l.

    adj_t_ref : (N, N)  adj^T, VMEM-resident for all layers (bf16 or f32)
    ego0_t_ref: (td, N) tile of ego_0^T (float32)
    out_t_ref : (td, N) tile of the layer-mean^T (float32)
    """
    adj_t = adj_t_ref[...]
    ego = ego0_t_ref[...].astype(jnp.float32)
    acc = ego  # running layer sum, kept in f32

    def layer(_, carry):
        ego, acc = carry
        # new_ego^T = ego^T @ adj^T  (== (adj @ ego)^T); MXU matmul, f32 accumulate.
        new_ego = jnp.dot(
            ego.astype(adj_t.dtype), adj_t, preferred_element_type=jnp.float32
        )
        return new_ego, acc + new_ego

    _, acc = lax.fori_loop(0, n_layers, layer, (ego, acc), unroll=True)
    out_t_ref[...] = (acc * (1.0 / (n_layers + 1))).astype(out_t_ref.dtype)


def _pick_d_tile(d):
    # Prefer >=2 parallel blocks (v7x has 2 TensorCores per chip) while keeping
    # the sublane (second-to-last) block dim a multiple of 8.
    if d >= 16 and d % 2 == 0 and (d // 2) % 8 == 0:
        return d // 2
    return d


@functools.partial(jax.jit, static_argnames=("n_ui_layers", "adj_dtype"))
def student_lightgcn_forward(
    adj,
    user_emb, item_emb,          # user_id_embedding / item_id_embedding weights
    user_emb_pre, item_emb_pre,  # user_id_embedding_pre / item_id_embedding_pre
    n_ui_layers,
    adj_dtype=jnp.bfloat16,
):
    """Pure-JAX wrapper reproducing Student_LightGCN.forward(adj)."""
    n_users, d = user_emb.shape
    n_items = item_emb.shape[0]
    n = n_users + n_items
    assert adj.shape == (n, n)

    # ego_0 = cat(user + user_pre, item + item_pre); transposed to (D, N) so the
    # lane (last) dim is N.  Stays fused with the kernel under this jit.
    ego0_t = jnp.concatenate(
        [user_emb + user_emb_pre, item_emb + item_emb_pre], axis=0
    ).T                                            # (D, N) float32
    adj_t = adj.T.astype(adj_dtype)                # (N, N); bf16 halves HBM traffic

    td = _pick_d_tile(d)
    grid = (pl.cdiv(d, td),)

    # adj must fit VMEM-resident (double-buffered input): budget against v7x's
    # 64 MiB so the same kernel runs on v5e / v6e / v7x.
    adj_vmem_bytes = 2 * n * n * jnp.dtype(adj_dtype).itemsize
    assert adj_vmem_bytes < 40 * 1024 * 1024, (
        "adj too large for the VMEM-resident fused kernel"
    )
    # TODO(synk): for N where dense adj does not fit in VMEM (real LightGCN
    # scale) or for a true sparse adj, a tiled / CSR-gather path is needed.

    out_t = pl.pallas_call(
        functools.partial(_fused_lightgcn_kernel, n_layers=n_ui_layers),
        out_shape=jax.ShapeDtypeStruct((d, n), jnp.float32),
        grid_spec=pltpu.PrefetchScalarGridSpec(
            num_scalar_prefetch=0,
            grid=grid,
            in_specs=[
                pl.BlockSpec((n, n), lambda i: (0, 0)),   # adj^T: fetched once, stays in VMEM
                pl.BlockSpec((td, n), lambda i: (i, 0)),  # ego_0^T tile
            ],
            out_specs=pl.BlockSpec((td, n), lambda i: (i, 0)),
        ),
        compiler_params=pltpu.CompilerParams(
            dimension_semantics=("parallel",),
            vmem_limit_bytes=48 * 1024 * 1024,
        ),
    )(adj_t, ego0_t)

    all_embeddings = out_t.T                       # (N, D)
    u_g_embeddings = all_embeddings[:n_users]
    i_g_embeddings = all_embeddings[n_users:n_users + n_items]
    return u_g_embeddings, i_g_embeddings


def _xavier_uniform(key, shape, dtype=jnp.float32):
    # torch xavier_uniform_ on a 2-D weight: bound = sqrt(6 / (rows + cols))
    bound = (6.0 / (shape[0] + shape[1])) ** 0.5
    return jax.random.uniform(key, shape, dtype, minval=-bound, maxval=bound)


def _build_norm_adj(key, n_users, n_items, p=0.08):
    """Deterministic symmetric-normalized bipartite adjacency (dense)."""
    n = n_users + n_items
    r = jax.random.bernoulli(key, p, (n_users, n_items)).astype(jnp.float32)
    a = jnp.zeros((n, n), jnp.float32)
    a = a.at[:n_users, n_users:].set(r)
    a = a.at[n_users:, :n_users].set(r.T)
    deg = jnp.maximum(a.sum(axis=1), 1.0)
    d_inv_sqrt = 1.0 / jnp.sqrt(deg)
    return a * d_inv_sqrt[:, None] * d_inv_sqrt[None, :]


if __name__ == "__main__":
    n_users, n_items, embedding_dim, gnn_layer = 48, 80, 32, 2
    N = n_users + n_items  # 128

    key = jax.random.PRNGKey(0)
    k_u, k_i, k_up, k_ip, k_adj = jax.random.split(key, 5)

    # Deterministic parameter init (shapes from __init__ / init_user_item_embed).
    user_emb = _xavier_uniform(k_u, (n_users, embedding_dim))
    item_emb = _xavier_uniform(k_i, (n_items, embedding_dim))
    user_emb_pre = _xavier_uniform(k_up, (n_users, embedding_dim))
    item_emb_pre = _xavier_uniform(k_ip, (n_items, embedding_dim))

    # TODO(synk): torch.sparse.mm consumes a sparse adj; densified here since a
    # sparse matmul has no direct Pallas equivalent at these sizes.
    adj = _build_norm_adj(k_adj, n_users, n_items)

    u_g, i_g = student_lightgcn_forward(
        adj, user_emb, item_emb, user_emb_pre, item_emb_pre,
        n_ui_layers=gnn_layer,
    )
    u_g, i_g = jax.block_until_ready((u_g, i_g))

    # Pure-JAX float32 reference of the same semantics.  The kernel uses bf16
    # adj for the matmul (f32 accumulation), so tolerances are loosened.
    ego_ref = jnp.concatenate(
        [user_emb + user_emb_pre, item_emb + item_emb_pre], axis=0
    )
    layers = [ego_ref]
    e = ego_ref
    for _ in range(gnn_layer):
        e = adj @ e
        layers.append(e)
    ref = jnp.stack(layers, axis=1).mean(axis=1)

    assert u_g.shape == (n_users, embedding_dim)
    assert i_g.shape == (n_items, embedding_dim)
    assert jnp.allclose(u_g, ref[:n_users], atol=2e-2, rtol=2e-2)
    assert jnp.allclose(i_g, ref[n_users:], atol=2e-2, rtol=2e-2)

    print("KERNEL_OK")
</pallas_src>

<mosaic_0001>
module attributes {stable_mosaic.version = 11 : i64} {
  func.func @_fused_lightgcn_kernel(%arg0: i32, %arg1: memref<128x128xbf16, #tpu.memory_space<vmem>>, %arg2: memref<16x128xf32, #tpu.memory_space<vmem>>, %arg3: memref<16x128xf32, #tpu.memory_space<vmem>>) attributes {dimension_semantics = [#tpu.dimension_semantics<parallel>], iteration_bounds = array<i64: 2>, scalar_prefetch = 0 : i64, scratch_operands = 0 : i64, tpu.core_type = #tpu.core_type<tc>, window_params = [{pipeline_mode = #tpu.pipeline_mode<synchronous>, transform_indices = @transform_0, window_bounds = array<i64: 128, 128>}, {transform_indices = @transform_1, window_bounds = array<i64: 16, 128>}, {transform_indices = @transform_2, window_bounds = array<i64: 16, 128>}]} {
    %c0 = arith.constant 0 : index
    %c0_0 = arith.constant 0 : index
    %0 = vector.load %arg1[%c0, %c0_0] : memref<128x128xbf16, #tpu.memory_space<vmem>>, vector<128x128xbf16>
    %c0_1 = arith.constant 0 : index
    %c0_2 = arith.constant 0 : index
    %1 = vector.load %arg2[%c0_1, %c0_2] : memref<16x128xf32, #tpu.memory_space<vmem>>, vector<16x128xf32>
    %c0_i32 = arith.constant 0 : i32
    %2 = arith.truncf %1 : vector<16x128xf32> to vector<16x128xbf16>
    %cst = arith.constant dense<0.000000e+00> : vector<16x128xf32>
    %3 = tpu.matmul %2, %0, %cst {dimension_numbers = #tpu.dot_dimension_numbers<[1], [0], [0], [1], [0, 0, 1, 1], [], []>} : vector<16x128xbf16>, vector<128x128xbf16>, vector<16x128xf32> -> vector<16x128xf32>
    %4 = arith.addf %1, %3 : vector<16x128xf32>
    %c1_i32 = arith.constant 1 : i32
    %5 = arith.truncf %3 : vector<16x128xf32> to vector<16x128xbf16>
    %cst_3 = arith.constant dense<0.000000e+00> : vector<16x128xf32>
    %6 = tpu.matmul %5, %0, %cst_3 {dimension_numbers = #tpu.dot_dimension_numbers<[1], [0], [0], [1], [0, 0, 1, 1], [], []>} : vector<16x128xbf16>, vector<128x128xbf16>, vector<16x128xf32> -> vector<16x128xf32>
    %7 = arith.addf %4, %6 : vector<16x128xf32>
    %cst_4 = arith.constant 0.333333343 : f32
    %8 = vector.broadcast %cst_4 : f32 to vector<16x128xf32>
    %9 = arith.mulf %7, %8 : vector<16x128xf32>
    %c0_5 = arith.constant 0 : index
    %c0_6 = arith.constant 0 : index
    %10 = vector.load %arg3[%c0_5, %c0_6] : memref<16x128xf32, #tpu.memory_space<vmem>>, vector<16x128xf32>
    tpu.vector_store %arg3[%c0_5, %c0_6], %9 {strides = array<i32>} : memref<16x128xf32, #tpu.memory_space<vmem>>, vector<16x128xf32>,
    return
  }
  func.func @transform_0(%arg0: i32) -> (i32, i32) {
    %c0_i32 = arith.constant 0 : i32
    %c0_i32_0 = arith.constant 0 : i32
    %c0_i32_1 = arith.constant 0 : i32
    return %c0_i32, %c0_i32_0 : i32, i32
  }
  func.func @transform_1(%arg0: i32) -> (i32, i32) {
    %c0_i32 = arith.constant 0 : i32
    %c0_i32_0 = arith.constant 0 : i32
    return %arg0, %c0_i32 : i32, i32
  }
  func.func @transform_2(%arg0: i32) -> (i32, i32) {
    %c0_i32 = arith.constant 0 : i32
    %c0_i32_0 = arith.constant 0 : i32
    return %arg0, %c0_i32 : i32, i32
  }
}

</mosaic_0001>

<llo_original>
// kernel: student_lightgcn_forward.1
$region0: #{student_lightgcn_forward.1}
  #allocation0 [shape = 'u32[]', space=smem, size = 0x4, offset = 0x4, fixed_abs, tag = 'smem constant byte address 0x4 - core index']
  #allocation1 [shape = 'u32[144,128]{1,0:T(1,128)}', space=vmem, size = 0x12000, scoped, tag = 'internal scratch']
  %s0 = inlined_call_operand.vmem [shape: bf16[128,128], index: 0, kind: input, shape index: {}]
  %s1 = inlined_call_operand.vmem [shape: f32[32,128], index: 1, kind: input, shape index: {}]
  %s2 = inlined_call_operand.vmem [shape: f32[32,128], index: 2, kind: output, shape index: {}]
  %s3 = sld [smem:[#allocation0]]
  $region41: #{student_lightgcn_forward.1} parent=0
    _
  %s5 = ssub.s32 1, %s3
  %s6 = scalar_select 0, %s5, %s3
  loop: start=0, step=1, limit=4
  $region2: #{student_lightgcn_forward.1} parent=0 // loop_pre_header
    _
  $region3: #{student_lightgcn_forward.1} parent=0 // loop_header
    %s8 = sphi 0, %s12
    %p9 = scmp.ge.s32.totalorder %s8, 4
    %s16 = sphi 0, %s16
    %s18 = sphi 0, %s16
    %s19 = sphi 0, %s18
    %s33 = sphi 0, %s19
    %s39 = sphi 0, %s41
    %s42 = sphi 0, %s39
    %s43 = sphi 0, %s42
    %s59 = sphi 0, %s43
    %s65 = sphi 0, %s67
    %s68 = sphi 0, %s65
    %s69 = sphi 0, %s68
    %s85 = sphi 0, %s69
  $region4: #{student_lightgcn_forward.1} parent=0 // loop_header_branch
    %11 = sbr.rel (%p9) target = $region8
  $region5: #{student_lightgcn_forward.1} parent=0 // loop_body
    %s13 = ssub.s32 %s8, 1
    %s14 = ssub.s32 %s8, 2
    %s15 = sadd.s32 %s8, 1
    %s17 = sadd.s32 %s16, 1
    %p20 = scmp.eq.s32.totalorder %s8, 1
    %p21 = scmp.ne.s32.totalorder %s16, %s18
    %p22 = scmp.eq.s32.totalorder %s8, 0
    %p23 = por %p21, %p22
    %p24 = scmp.ne.s32.totalorder %s16, %s18
    %p25 = scmp.eq.s32.totalorder %s13, 1
    %p26 = por %p24, %p25
    %p27 = scmp.ne.s32.totalorder %s18, %s19
    %p28 = scmp.eq.s32.totalorder %s13, 0
    %p29 = por %p27, %p28
    %p30 = scmp.ne.s32.totalorder %s18, %s19
    %p31 = scmp.eq.s32.totalorder %s14, 1
    %p32 = por %p30, %p31
    %p34 = scmp.ne.s32.totalorder %s19, %s33
    %p35 = scmp.eq.s32.totalorder %s14, 0
    %p36 = por %p34, %p35
    %s37 = ssub.s32 %s8, %s15
    %p38 = scmp.eq.s32.totalorder %s37, 0
    %s40 = sadd.s32 %s39, 1
    %s41 = scalar_select %p38, %s39, %s40
    %p44 = pneg %p38
    %p45 = scmp.eq.s32.totalorder %s8, 1
    %p46 = por %p44, %p45
    %p47 = scmp.ne.s32.totalorder %s39, %s42
    %p48 = scmp.eq.s32.totalorder %s8, 0
    %p49 = por %p47, %p48
    %p50 = scmp.ne.s32.totalorder %s39, %s42
    %p51 = scmp.eq.s32.totalorder %s13, 1
    %p52 = por %p50, %p51
    %p53 = scmp.ne.s32.totalorder %s42, %s43
    %p54 = scmp.eq.s32.totalorder %s13, 0
    %p55 = por %p53, %p54
    %p56 = scmp.ne.s32.totalorder %s42, %s43
    %p57 = scmp.eq.s32.totalorder %s14, 1
    %p58 = por %p56, %p57
    %p60 = scmp.ne.s32.totalorder %s43, %s59
    %p61 = scmp.eq.s32.totalorder %s14, 0
    %p62 = por %p60, %p61
    %s63 = ssub.s32 %s8, %s15
    %p64 = scmp.eq.s32.totalorder %s63, 0
    %s66 = sadd.s32 %s65, 1
    %s67 = scalar_select %p64, %s65, %s66
    %p70 = pneg %p64
    %p71 = scmp.eq.s32.totalorder %s8, 1
    %p72 = por %p70, %p71
    %p73 = scmp.ne.s32.totalorder %s65, %s68
    %p74 = scmp.eq.s32.totalorder %s8, 0
    %p75 = por %p73, %p74
    %p76 = scmp.ne.s32.totalorder %s65, %s68
    %p77 = scmp.eq.s32.totalorder %s13, 1
    %p78 = por %p76, %p77
    %p79 = scmp.ne.s32.totalorder %s68, %s69
    %p80 = scmp.eq.s32.totalorder %s13, 0
    %p81 = por %p79, %p80
    %p82 = scmp.ne.s32.totalorder %s68, %s69
    %p83 = scmp.eq.s32.totalorder %s14, 1
    %p84 = por %p82, %p83
    %p86 = scmp.ne.s32.totalorder %s69, %s85
    %p87 = scmp.eq.s32.totalorder %s14, 0
    %p88 = por %p86, %p87
    %p89 = scmp.le.s32.totalorder 1, %s8
    %p90 = scmp.lt.s32.totalorder %s8, 3
    %p91 = pnand %p89, %p90
    %p92 = pneg %p91
    // Predicated region
    $region9: #{student_lightgcn_forward.1} parent=5 // pred_check
      _
    $region10: #{student_lightgcn_forward.1} parent=5 // pred_check_branch
      %94 = sbr.rel (%p91) target = $region12
    $region11: #{student_lightgcn_forward.1} parent=5 // pred_region
      %s95 = ssub.s32 %s8, 1
      // Predicated region
      $region13: #{student_lightgcn_forward.1} parent=11 // pred_check
        %p96 = pneg %p29
      $region14: #{student_lightgcn_forward.1} parent=11 // pred_check_branch
        %98 = sbr.rel (%p96) target = $region16
      $region15: #{student_lightgcn_forward.1} parent=11 // pred_region
        _
      $region16: #{student_lightgcn_forward.1} parent=11 // pred_fallthru
        _
    $region12: #{student_lightgcn_forward.1} parent=5 // pred_fallthru
      _
    %p99 = scmp.lt.s32.totalorder %s8, 2
    // Predicated region
    $region17: #{student_lightgcn_forward.1} parent=5 // pred_check
      %p100 = pneg %p99
    $region18: #{student_lightgcn_forward.1} parent=5 // pred_check_branch
      %102 = sbr.rel (%p100) target = $region20
    $region19: #{student_lightgcn_forward.1} parent=5 // pred_region
      // Predicated region
      $region21: #{student_lightgcn_forward.1} parent=19 // pred_check
        %p103 = pneg %p49
      $region22: #{student_lightgcn_forward.1} parent=19 // pred_check_branch
        %105 = sbr.rel (%p103) target = $region24
      $region23: #{student_lightgcn_forward.1} parent=19 // pred_region
        %s106 = smul.u32 2, %s8
        %p107 = scmp.lt.s32.totalorder %s106, 3
        %s108 = scalar_select %p107, %s106, 3
        %s109 = smul.addr %s108, 8
        %s110 = scalar_lea.vmem %s1, %s109
        %s111 = smul.u32 2, %s8
      $region24: #{student_lightgcn_forward.1} parent=19 // pred_fallthru
        _
    $region20: #{student_lightgcn_forward.1} parent=5 // pred_fallthru
      _
    %p112 = scmp.le.s32.totalorder 1, %s8
    %p113 = scmp.lt.s32.totalorder %s8, 3
    %p114 = pnand %p112, %p113
    %p115 = pneg %p114
    // Predicated region
    $region25: #{student_lightgcn_forward.1} parent=5 // pred_check
      _
    $region26: #{student_lightgcn_forward.1} parent=5 // pred_check_branch
      %117 = sbr.rel (%p114) target = $region28
    $region27: #{student_lightgcn_forward.1} parent=5 // pred_region
      %s118 = ssub.s32 %s8, 1
      %p119 = pneg %p29
      %p120 = pneg %p26
      %s121 = smul.u32 2, %s13
      %p122 = scmp.lt.s32.totalorder %s121, 3
      %s123 = scalar_select %p122, %s121, 3
      %s124 = smul.addr %s123, 8
      %s125 = scalar_lea.vmem %s1, %s124
      %p126 = pneg %p55
      %p127 = pneg %p52
      %p128 = pneg %p81
      %p129 = pneg %p78
      %s130 = smul.u32 2, %s13
      %p131 = scmp.lt.s32.totalorder %s130, 3
      %s132 = scalar_select %p131, %s130, 3
      %s133 = smul.addr %s132, 8
      %s134 = scalar_lea.vmem %s2, %s133
      %s135 = smul.u32 2, %s13
      %p136 = scmp.lt.s32.totalorder %s135, 3
      %s137 = scalar_select %p136, %s135, 3
      %s138 = smul.addr %s137, 8
      %s139 = scalar_lea.vmem %s1, %s138
      %s140 = smul.u32 2, %s13
      %s141 = smul.u32 2, %s13
      %p142 = scmp.lt.s32.totalorder %s141, 3
      %s143 = scalar_select %p142, %s141, 3
      %s144 = smul.addr %s143, 8
      %s145 = scalar_lea.vmem %s2, %s144
      %s146 = smul.u32 2, %s13
      %v148 = vld [vmem:[%s0] sm:$0xf]
      %v149 = vld [vmem:[%s0 + $0x4] sm:$0xf]
      %v150 = vld [vmem:[%s0 + $0x8] sm:$0xf]
      %v151 = vld [vmem:[%s0 + $0xc] sm:$0xf]
      %v152 = vld [vmem:[%s0 + $0x10] sm:$0xf]
      %v153 = vld [vmem:[%s0 + $0x14] sm:$0xf]
      %v154 = vld [vmem:[%s0 + $0x18] sm:$0xf]
      %v155 = vld [vmem:[%s0 + $0x1c] sm:$0xf]
      %v156 = vld [vmem:[%s0 + $0x20] sm:$0xf]
      %v157 = vld [vmem:[%s0 + $0x24] sm:$0xf]
      %v158 = vld [vmem:[%s0 + $0x28] sm:$0xf]
      %v159 = vld [vmem:[%s0 + $0x2c] sm:$0xf]
      %v160 = vld [vmem:[%s0 + $0x30] sm:$0xf]
      %v161 = vld [vmem:[%s0 + $0x34] sm:$0xf]
      %v162 = vld [vmem:[%s0 + $0x38] sm:$0xf]
      %v163 = vld [vmem:[%s0 + $0x3c] sm:$0xf]
      %v164 = vld [vmem:[%s139] sm:$0xff]
      %v165 = vld [vmem:[%s139 + $0x8] sm:$0xff]
      %v166 = vpack.c.bf16 %v165, %v164
      %v183 = vunpack.c.l.b16 %v148
      %v184 = vunpack.c.l.b16 %v149
      %v185 = vunpack.c.l.b16 %v150
      %v186 = vunpack.c.l.b16 %v151
      %v187 = vunpack.c.l.b16 %v152
      %v188 = vunpack.c.l.b16 %v153
      %v189 = vunpack.c.l.b16 %v154
      %v190 = vunpack.c.l.b16 %v155
      %v191 = vunpack.c.l.b16 %v156
      %v192 = vunpack.c.l.b16 %v157
      %v193 = vunpack.c.l.b16 %v158
      %v194 = vunpack.c.l.b16 %v159
      %v195 = vunpack.c.l.b16 %v160
      %v196 = vunpack.c.l.b16 %v161
      %v197 = vunpack.c.l.b16 %v162
      %v198 = vunpack.c.l.b16 %v163
      %v199 = vpack.c.b16 %v184, %v183
      %v200 = vpack.c.b16 %v186, %v185
      %v201 = vpack.c.b16 %v188, %v187
      %v202 = vpack.c.b16 %v190, %v189
      %v203 = vpack.c.b16 %v192, %v191
      %v204 = vpack.c.b16 %v194, %v193
      %v205 = vpack.c.b16 %v196, %v195
      %v206 = vpack.c.b16 %v198, %v197
      %215 = vmatprep.subr.bf16.mxu0 0
      %216 = vmatpush1.bf16.msra.mxu0 %v206
      %217 = vmatprep.subr.bf16.mxu0 0
      %218 = vmatpush1.bf16.msra.mxu0 %v205
      %219 = vmatprep.subr.bf16.mxu0 0
      %220 = vmatpush1.bf16.msra.mxu0 %v204
      %221 = vmatprep.subr.bf16.mxu0 0
      %222 = vmatpush1.bf16.msra.mxu0 %v203
      %223 = vmatprep.subr.bf16.mxu0 0
      %224 = vmatpush1.bf16.msra.mxu0 %v202
      %225 = vmatprep.subr.bf16.mxu0 0
      %226 = vmatpush1.bf16.msra.mxu0 %v201
      %227 = vmatprep.subr.bf16.mxu0 0
      %228 = vmatpush1.bf16.msra.mxu0 %v200
      %229 = vmatprep.subr.bf16.mxu0 0
      %230 = vmatpush1.bf16.msra.mxu0 %v199
      %231 = vmatprep.subr.bf16.mxu0 0
      %232 = vmatpush2.bf16.msra.mxu0 0
      %233 = vmatprep.subr.bf16.mxu0 0
      %234 = vmatpush2.bf16.msra.mxu0 0
      %235 = vmatprep.subr.bf16.mxu0 0
      %236 = vmatpush2.bf16.msra.mxu0 0
      %237 = vmatprep.subr.bf16.mxu0 0
      %238 = vmatpush2.bf16.msra.mxu0 0
      %239 = vmatprep.subr.bf16.mxu0 0
      %240 = vmatpush2.bf16.msra.mxu0 0
      %241 = vmatprep.subr.bf16.mxu0 0
      %242 = vmatpush2.bf16.msra.mxu0 0
      %243 = vmatprep.subr.bf16.mxu0 0
      %244 = vmatpush2.bf16.msra.mxu0 0
      %245 = vmatprep.subr.bf16.mxu0 0
      %246 = vmatpush2.bf16.msra.mxu0 0
      %247 = vmatprep.mubr.bf16.mxu0 0
      %248 = vmatmul.mubr.bf16.gmra.mxu0 %v166
      %v249 = vpop.f32.mrf.mxu0
      %v250 = vadd.f32 0.0, %v249
      %v251 = vpop.f32.mrf.mxu0
      %v252 = vpop.f32.mrf.mxu0
      %v253 = vadd.f32 0.0, %v252
      %v254 = vpop.f32.mrf.mxu0
      %255 = vdwg.mxu0
      %v256 = vadd.f32 %v164, %v250
      %v257 = vadd.f32 %v165, %v253
      %v258 = vpack.c.bf16 %v253, %v250
      %259 = vmatprep.subr.bf16.mxu0 0
      %260 = vmatpush1.bf16.msra.mxu0 %v206
      %261 = vmatprep.subr.bf16.mxu0 0
      %262 = vmatpush1.bf16.msra.mxu0 %v205
      %263 = vmatprep.subr.bf16.mxu0 0
      %264 = vmatpush1.bf16.msra.mxu0 %v204
      %265 = vmatprep.subr.bf16.mxu0 0
      %266 = vmatpush1.bf16.msra.mxu0 %v203
      %267 = vmatprep.subr.bf16.mxu0 0
      %268 = vmatpush1.bf16.msra.mxu0 %v202
      %269 = vmatprep.subr.bf16.mxu0 0
      %270 = vmatpush1.bf16.msra.mxu0 %v201
      %271 = vmatprep.subr.bf16.mxu0 0
      %272 = vmatpush1.bf16.msra.mxu0 %v200
      %273 = vmatprep.subr.bf16.mxu0 0
      %274 = vmatpush1.bf16.msra.mxu0 %v199
      %275 = vmatprep.subr.bf16.mxu0 0
      %276 = vmatpush2.bf16.msra.mxu0 0
      %277 = vmatprep.subr.bf16.mxu0 0
      %278 = vmatpush2.bf16.msra.mxu0 0
      %279 = vmatprep.subr.bf16.mxu0 0
      %280 = vmatpush2.bf16.msra.mxu0 0
      %281 = vmatprep.subr.bf16.mxu0 0
      %282 = vmatpush2.bf16.msra.mxu0 0
      %283 = vmatprep.subr.bf16.mxu0 0
      %284 = vmatpush2.bf16.msra.mxu0 0
      %285 = vmatprep.subr.bf16.mxu0 0
      %286 = vmatpush2.bf16.msra.mxu0 0
      %287 = vmatprep.subr.bf16.mxu0 0
      %288 = vmatpush2.bf16.msra.mxu0 0
      %289 = vmatprep.subr.bf16.mxu0 0
      %290 = vmatpush2.bf16.msra.mxu0 0
      %291 = vmatprep.mubr.bf16.mxu0 0
      %292 = vmatmul.mubr.bf16.gmra.mxu0 %v258
      %v293 = vpop.f32.mrf.mxu0
      %v294 = vadd.f32 0.0, %v293
      %v295 = vpop.f32.mrf.mxu0
      %v296 = vpop.f32.mrf.mxu0
      %v297 = vadd.f32 0.0, %v296
      %v298 = vpop.f32.mrf.mxu0
      %299 = vdwg.mxu0
      %v300 = vadd.f32 %v256, %v294
      %v301 = vadd.f32 %v257, %v297
      %v302 = vmul.f32 %v300, 0.33333334
      %v303 = vmul.f32 %v301, 0.33333334
      %304 = vst [vmem:[%s145] sm:$0xff] %v302
      %305 = vst [vmem:[%s145 + $0x8] sm:$0xff] %v303
      %s306 = smul.u32 2, %s13
      %p307 = scmp.lt.s32.totalorder %s306, 3
      %s308 = scalar_select %p307, %s306, 3
      %s309 = smul.addr %s308, 8
      %s310 = scalar_lea.vmem %s2, %s309
      // Predicated region
      $region29: #{student_lightgcn_forward.1} parent=27 // pred_check
        %p311 = pneg %p78
      $region30: #{student_lightgcn_forward.1} parent=27 // pred_check_branch
        %313 = sbr.rel (%p311) target = $region32
      $region31: #{student_lightgcn_forward.1} parent=27 // pred_region
        %s314 = smul.u32 2, %s13
      $region32: #{student_lightgcn_forward.1} parent=27 // pred_fallthru
        _
    $region28: #{student_lightgcn_forward.1} parent=5 // pred_fallthru
      _
    %p315 = scmp.le.s32.totalorder 2, %s8
    // Predicated region
    $region33: #{student_lightgcn_forward.1} parent=5 // pred_check
      %p316 = pneg %p315
    $region34: #{student_lightgcn_forward.1} parent=5 // pred_check_branch
      %318 = sbr.rel (%p316) target = $region36
    $region35: #{student_lightgcn_forward.1} parent=5 // pred_region
      %s319 = ssub.s32 %s8, 2
      // Predicated region
      $region37: #{student_lightgcn_forward.1} parent=35 // pred_check
        %p320 = pneg %p84
      $region38: #{student_lightgcn_forward.1} parent=35 // pred_check_branch
        %322 = sbr.rel (%p320) target = $region40
      $region39: #{student_lightgcn_forward.1} parent=35 // pred_region
        %s323 = smul.u32 2, %s14
        %p324 = scmp.lt.s32.totalorder %s323, 3
        %s325 = scalar_select %p324, %s323, 3
        %s326 = smul.addr %s325, 8
        %s327 = scalar_lea.vmem %s2, %s326
      $region40: #{student_lightgcn_forward.1} parent=35 // pred_fallthru
        _
    $region36: #{student_lightgcn_forward.1} parent=5 // pred_fallthru
      _
  $region6: #{student_lightgcn_forward.1} parent=0 // loop_footer
    %s12 = sadd.s32 1, %s8
  $region7: #{student_lightgcn_forward.1} parent=0 // loop_footer_branch
    %7 = sbr.rel target = $region3
  $region8: #{student_lightgcn_forward.1} parent=0 // loop_exit
    _

</llo_original>
